<compile_context>
chip_gen: v6e
topology: v6e:2x2x1
jax: 0.10.0
libtpu: 0.0.40
codegen_flags: <defaults>
</compile_context>

<pallas_src>
import functools

import jax
import jax.numpy as jnp
from jax import lax
from jax.experimental import pallas as pl
from jax.experimental.pallas import tpu as pltpu


def _residual_block_kernel(x_ref, halo_ref, w1_ref, b1_ref, w2_ref, b2_ref, *rest,
                           L, K, dilation, pad_left, pad_right, tile_l, main_off,
                           has_downsample):
    # Refs per grid step (b, j):
    #   x_ref   : (Cin, tile_l)     main x tile, read straight from the (B, Cin, L) input
    #   halo_ref: (Cin, hl+hr)      left (hl=2*pad_left) + right (hr=2*pad_right) halo cols
    #   w1_ref  : (K, Cout, Cin)    conv1 weights, one (Cout, Cin) slice per tap
    #   w2_ref  : (K, Cout, Cout)   conv2 weights
    #   b*_ref  : (Cout, 1) f32
    #   [wd_ref : (Cout, Cin), bd_ref: (Cout, 1)]  only when has_downsample
    #   o_ref   : (Cout, tile_l)
    #   win_ref : VMEM scratch (Cin, main_off + tile_l + hr)  haloed x window
    #   hwin_ref: VMEM scratch (Cout, tile_l + total_pad)     hidden activation window
    if has_downsample:
        wd_ref, bd_ref, o_ref, win_ref, hwin_ref = rest
    else:
        o_ref, win_ref, hwin_ref = rest

    d = dilation
    tl = tile_l
    total_pad = pad_left + pad_right
    tlh = tl + total_pad                  # conv2 needs h on [t0 - pad_left, t0 + tl + pad_right)
    hl, hr = 2 * pad_left, 2 * pad_right
    base = main_off - hl                  # physical column of logical window col 0
    j = pl.program_id(1)
    t0 = j * tl                           # first output position of this tile

    # ---- assemble the haloed x window in VMEM (main-tile store is lane-aligned) ----
    if hl:
        win_ref[:, base:main_off] = halo_ref[:, 0:hl]
    win_ref[:, main_off:main_off + tl] = x_ref[...]
    if hr:
        win_ref[:, main_off + tl:main_off + tl + hr] = halo_ref[:, hl:hl + hr]

    # The DMA of the last (ragged) x block reads past L: zero that tail so it acts as
    # conv zero padding.  Interior tiles skip this entirely.
    @pl.when(t0 + tl > L)
    def _():
        col = lax.broadcasted_iota(jnp.int32, (1, tl), 1)
        tile = win_ref[:, main_off:main_off + tl]
        win_ref[:, main_off:main_off + tl] = jnp.where(
            col < (L - t0), tile, 0).astype(win_ref.dtype)

    # ---- conv1 ('same', dilated): K taps, value accumulation, one MXU dot per tap ----
    y1 = jnp.dot(w1_ref[0], win_ref[:, base:base + tlh],
                 preferred_element_type=jnp.float32)
    for k in range(1, K):                 # K is tiny & static -> unrolled
        y1 = y1 + jnp.dot(w1_ref[k], win_ref[:, base + k * d:base + k * d + tlh],
                          preferred_element_type=jnp.float32)
    # bias + ReLU (dropout1 == identity at inference); write the scratch exactly once
    hwin_ref[...] = jnp.maximum(y1 + b1_ref[...], 0.0).astype(hwin_ref.dtype)

    # conv2's zero padding: h positions outside [0, L) must be 0.  Only boundary tiles
    # contain such positions -> pl.when skips the select on interior tiles.
    @pl.when(jnp.logical_or(j == 0, t0 + tl + pad_right > L))
    def _():
        hpos = (t0 - pad_left) + lax.broadcasted_iota(jnp.int32, (1, tlh), 1)
        ok = jnp.logical_and(hpos >= 0, hpos < L)
        hwin_ref[...] = jnp.where(ok, hwin_ref[...], 0).astype(hwin_ref.dtype)

    # ---- conv2 ('same', dilated): value accumulation again ----
    y2 = jnp.dot(w2_ref[0], hwin_ref[:, 0:tl], preferred_element_type=jnp.float32)
    for k in range(1, K):
        y2 = y2 + jnp.dot(w2_ref[k], hwin_ref[:, k * d:k * d + tl],
                          preferred_element_type=jnp.float32)
    out2 = jnp.maximum(y2 + b2_ref[...], 0.0)        # relu2 (+ dropout2 == identity)

    # ---- residual path ----
    xc = win_ref[:, main_off:main_off + tl]           # this tile's x (lane-aligned read)
    if has_downsample:
        res = jnp.dot(wd_ref[...], xc, preferred_element_type=jnp.float32) + bd_ref[...]
    else:                                             # in_channels == out_channels
        res = xc.astype(jnp.float32)

    o_ref[...] = jnp.maximum(out2 + res, 0.0).astype(o_ref.dtype)


def residual_block_pallas(x, w1, b1, w2, b2, wd=None, bd=None, *, dilation,
                          tile_l=2048, compute_dtype=None):
    """ResidualBlock forward (inference semantics: dropout == identity).

    x : (B, in_ch, L).  PyTorch weight layouts: w1 (out_ch, in_ch, K),
    w2 (out_ch, out_ch, K), wd (out_ch, in_ch, 1) or None (identity residual,
    requires in_ch == out_ch).  compute_dtype=jnp.bfloat16 halves HBM/VMEM traffic
    (f32 accumulation kept); default preserves the input dtype (f32 parity).
    """
    B, Cin, L = x.shape
    Cout, _, K = w1.shape
    out_dtype = x.dtype
    if compute_dtype is None:
        compute_dtype = x.dtype
    if wd is None and Cin != Cout:
        raise ValueError("identity residual requires in_channels == out_channels")

    total_pad = dilation * (K - 1)        # PyTorch 'same': left = total//2, rest right
    pad_left = total_pad // 2
    pad_right = total_pad - pad_left
    hl, hr = 2 * pad_left, 2 * pad_right
    main_off = ((hl + 127) // 128) * 128 if hl else 0

    cb = jnp.dtype(compute_dtype).itemsize
    ob = jnp.dtype(out_dtype).itemsize

    # ---- per-generation VMEM budget (v5e/v6e: 128 MiB, v7x: 64 MiB per TensorCore) ----
    try:
        cap = int(getattr(pltpu.get_tpu_info(), "vmem_capacity_bytes", 64 * 2**20))
    except Exception:
        cap = 64 * 2**20                  # conservative fallback (safe on every generation)
    budget = (cap * 3) // 5               # working-set target; leaves pipeline headroom

    def est_bytes(tl_):
        tlh_ = tl_ + total_pad
        io = 2 * (Cin * tl_ * cb + Cin * max(hl + hr, 1) * cb + Cout * tl_ * ob)
        wts = 2 * (K * Cout * Cin + K * Cout * Cout + Cout * Cin + 3 * Cout) * 4
        scratch = Cin * (main_off + tl_ + hr) * cb + Cout * tlh_ * cb
        vals = 2 * Cout * tlh_ * 4 + 2 * Cout * tl_ * 4
        return io + wts + scratch + vals

    # ---- choose the L tile: lane-dense multiple of 128, as big as fits the budget ----
    if L <= tile_l:
        tl, n_l = L, 1                    # single tile: block == full dim, any L allowed
    else:
        tl = max(128, (tile_l // 128) * 128)
        while tl > 128 and est_bytes(tl) > budget:
            tl = max(128, ((tl // 2) // 128) * 128)
        n_l = -(-L // tl)
    vmem_limit = int(min(cap - (4 << 20), max(2 * est_bytes(tl), 32 << 20)))

    # ---- host-side gather of ONLY the tiny per-tile halo columns (~halo/tile of x) ----
    xc = x.astype(compute_dtype)

    def _halo_part(shift, width):
        """(B, Cin, n_l, width): x positions j*tl + shift + c, zero outside [0, L)."""
        need_left = max(0, -shift)
        need_right = max(0, (n_l - 1) * tl + shift + width - L)
        xp = jnp.pad(xc, ((0, 0), (0, 0), (need_left, need_right)))
        start0 = shift + need_left
        if width <= tl:
            tail = xp[:, :, start0:]
            short = n_l * tl - tail.shape[-1]
            if short > 0:
                tail = jnp.pad(tail, ((0, 0), (0, 0), (0, short)))
            return tail[:, :, :n_l * tl].reshape(B, Cin, n_l, tl)[..., :width]
        # degenerate (halo wider than the tile): tiny explicit gather
        return jnp.stack([xp[:, :, start0 + i * tl:start0 + i * tl + width]
                          for i in range(n_l)], axis=2)

    if hl + hr > 0:
        parts = []
        if hl:
            parts.append(_halo_part(-hl, hl))
        if hr:
            parts.append(_halo_part(tl, hr))
        halo = parts[0] if len(parts) == 1 else jnp.concatenate(parts, axis=-1)
        halo = jnp.transpose(halo, (0, 2, 1, 3))          # (B, n_l, Cin, hl+hr)
    else:                                                  # K == 1: no halo needed
        halo = jnp.zeros((B, n_l, Cin, 1), compute_dtype)
    halo_w = halo.shape[-1]

    # ---- weights: PyTorch layout -> per-tap (K, Cout, C) slabs; biases f32 (Cout, 1) ----
    w1k = jnp.transpose(w1, (2, 0, 1)).astype(compute_dtype)     # (K, Cout, Cin)
    w2k = jnp.transpose(w2, (2, 0, 1)).astype(compute_dtype)     # (K, Cout, Cout)
    b1r = b1.reshape(Cout, 1).astype(jnp.float32)
    b2r = b2.reshape(Cout, 1).astype(jnp.float32)

    has_downsample = wd is not None
    inputs = [xc, halo, w1k, b1r, w2k, b2r]
    in_specs = [
        pl.BlockSpec((None, Cin, tl), lambda b, j: (b, 0, j)),                # x tile (direct)
        pl.BlockSpec((None, None, Cin, halo_w), lambda b, j: (b, j, 0, 0)),   # halo columns
        pl.BlockSpec((K, Cout, Cin), lambda b, j: (0, 0, 0)),                 # w1
        pl.BlockSpec((Cout, 1), lambda b, j: (0, 0)),                         # b1
        pl.BlockSpec((K, Cout, Cout), lambda b, j: (0, 0, 0)),                # w2
        pl.BlockSpec((Cout, 1), lambda b, j: (0, 0)),                         # b2
    ]
    if has_downsample:
        wdk = wd[:, :, 0].astype(compute_dtype)                               # (Cout, Cin)
        bdr = (bd if bd is not None else jnp.zeros((Cout,), jnp.float32))
        bdr = bdr.reshape(Cout, 1).astype(jnp.float32)
        inputs += [wdk, bdr]
        in_specs += [pl.BlockSpec((Cout, Cin), lambda b, j: (0, 0)),
                     pl.BlockSpec((Cout, 1), lambda b, j: (0, 0))]

    kernel = functools.partial(
        _residual_block_kernel, L=L, K=K, dilation=dilation, pad_left=pad_left,
        pad_right=pad_right, tile_l=tl, main_off=main_off,
        has_downsample=has_downsample)

    return pl.pallas_call(
        kernel,
        out_shape=jax.ShapeDtypeStruct((B, Cout, L), out_dtype),  # ragged last block masked
        grid_spec=pltpu.PrefetchScalarGridSpec(
            num_scalar_prefetch=0,
            grid=(B, n_l),
            in_specs=in_specs,
            out_specs=pl.BlockSpec((None, Cout, tl), lambda b, j: (b, 0, j)),
            scratch_shapes=[
                pltpu.VMEM((Cin, main_off + tl + hr), compute_dtype),   # haloed x window
                pltpu.VMEM((Cout, tl + total_pad), compute_dtype),      # hidden activation
            ],
        ),
        compiler_params=pltpu.CompilerParams(
            dimension_semantics=("parallel", "parallel"),  # no carry -> v7x megacore splits
            vmem_limit_bytes=vmem_limit),
    )(*inputs)


def residual_block_ref(x, w1, b1, w2, b2, wd=None, bd=None, *, dilation):
    """Pure-JAX reference mirroring the PyTorch forward in eval mode (f32-accurate)."""
    K = w1.shape[2]
    total_pad = dilation * (K - 1)
    pad_left = total_pad // 2
    pad_right = total_pad - pad_left
    dn = ('NCH', 'OIH', 'NCH')

    def conv(v, w, b, dil, pad):
        y = lax.conv_general_dilated(v, w, window_strides=(1,), padding=pad,
                                     rhs_dilation=(dil,), dimension_numbers=dn,
                                     precision=lax.Precision.HIGHEST)
        return y + b[None, :, None]

    out = conv(x, w1, b1, dilation, [(pad_left, pad_right)])
    out = jnp.maximum(out, 0.0)                                   # relu1 (+ dropout1 = id)
    out = conv(out, w2, b2, dilation, [(pad_left, pad_right)])
    out = jnp.maximum(out, 0.0)                                   # relu2 (+ dropout2 = id)
    out = out[:, :, :x.shape[2]]                                  # no-op with 'same'
    res = x if wd is None else conv(x, wd, bd, 1, [(0, 0)])
    return jnp.maximum(out + res, 0.0)


if __name__ == "__main__":
    B, Cin, Cout, K, dilation = 2, 4, 8, 3, 2     # dropout -> identity at inference
    key = jax.random.PRNGKey(0)
    ks = jax.random.split(key, 10)
    w1 = jax.random.normal(ks[1], (Cout, Cin, K), jnp.float32) * 0.1
    b1 = jax.random.normal(ks[2], (Cout,), jnp.float32) * 0.1
    w2 = jax.random.normal(ks[3], (Cout, Cout, K), jnp.float32) * 0.1
    b2 = jax.random.normal(ks[4], (Cout,), jnp.float32) * 0.1
    wd = jax.random.normal(ks[5], (Cout, Cin, 1), jnp.float32) * 0.1
    bd = jax.random.normal(ks[6], (Cout,), jnp.float32) * 0.1

    # --- case 1: tiny L, 1x1 downsample residual, single L tile, f32 compute ---
    L = 16
    x = jax.random.normal(ks[0], (B, Cin, L), jnp.float32)
    ref = residual_block_ref(x, w1, b1, w2, b2, wd, bd, dilation=dilation)
    out = jax.block_until_ready(
        residual_block_pallas(x, w1, b1, w2, b2, wd, bd, dilation=dilation))
    assert out.shape == (B, Cout, L), out.shape
    # tolerance covers possible bf16-pass rounding inside the f32 MXU matmuls
    assert jnp.allclose(out, ref, atol=5e-3, rtol=5e-3), \
        float(jnp.max(jnp.abs(out - ref)))

    # --- case 2: identity residual (in_ch == out_ch), L tiling + ragged last tile ---
    L2 = 320
    x2 = jax.random.normal(ks[7], (B, Cout, L2), jnp.float32)
    w1b = jax.random.normal(ks[8], (Cout, Cout, K), jnp.float32) * 0.1
    ref2 = residual_block_ref(x2, w1b, b1, w2, b2, None, None, dilation=dilation)
    out2 = jax.block_until_ready(
        residual_block_pallas(x2, w1b, b1, w2, b2, None, None,
                              dilation=dilation, tile_l=128))
    assert out2.shape == (B, Cout, L2), out2.shape
    assert jnp.allclose(out2, ref2, atol=5e-3, rtol=5e-3), \
        float(jnp.max(jnp.abs(out2 - ref2)))

    # --- case 3: optional bf16 compute path (f32 accumulation), loose tolerance ---
    out3 = jax.block_until_ready(
        residual_block_pallas(x, w1, b1, w2, b2, wd, bd, dilation=dilation,
                              compute_dtype=jnp.bfloat16))
    assert jnp.allclose(out3, ref, atol=5e-2, rtol=5e-2), \
        float(jnp.max(jnp.abs(out3 - ref)))

    print("KERNEL_OK")
</pallas_src>

<mosaic_0001>
module attributes {stable_mosaic.version = 11 : i64} {
  func.func @_residual_block_kernel(%arg0: i32, %arg1: i32, %arg2: memref<1x4x16xf32, #tpu.memory_space<vmem>>, %arg3: memref<1x1x4x8xf32, #tpu.memory_space<vmem>>, %arg4: memref<3x8x4xf32, #tpu.memory_space<vmem>>, %arg5: memref<8x1xf32, #tpu.memory_space<vmem>>, %arg6: memref<3x8x8xf32, #tpu.memory_space<vmem>>, %arg7: memref<8x1xf32, #tpu.memory_space<vmem>>, %arg8: memref<8x4xf32, #tpu.memory_space<vmem>>, %arg9: memref<8x1xf32, #tpu.memory_space<vmem>>, %arg10: memref<1x8x16xf32, #tpu.memory_space<vmem>>, %arg11: memref<4x148xf32, #tpu.memory_space<vmem>>, %arg12: memref<8x20xf32, #tpu.memory_space<vmem>>) attributes {dimension_semantics = [#tpu.dimension_semantics<parallel>, #tpu.dimension_semantics<parallel>], iteration_bounds = array<i64: 2, 1>, scalar_prefetch = 0 : i64, scratch_operands = 2 : i64, tpu.core_type = #tpu.core_type<tc>, window_params = [{transform_indices = @transform_0, window_bounds = array<i64: 1, 4, 16>}, {transform_indices = @transform_1, window_bounds = array<i64: 1, 1, 4, 8>}, {pipeline_mode = #tpu.pipeline_mode<synchronous>, transform_indices = @transform_2, window_bounds = array<i64: 3, 8, 4>}, {pipeline_mode = #tpu.pipeline_mode<synchronous>, transform_indices = @transform_3, window_bounds = array<i64: 8, 1>}, {pipeline_mode = #tpu.pipeline_mode<synchronous>, transform_indices = @transform_4, window_bounds = array<i64: 3, 8, 8>}, {pipeline_mode = #tpu.pipeline_mode<synchronous>, transform_indices = @transform_5, window_bounds = array<i64: 8, 1>}, {pipeline_mode = #tpu.pipeline_mode<synchronous>, transform_indices = @transform_6, window_bounds = array<i64: 8, 4>}, {pipeline_mode = #tpu.pipeline_mode<synchronous>, transform_indices = @transform_7, window_bounds = array<i64: 8, 1>}, {transform_indices = @transform_8, window_bounds = array<i64: 1, 8, 16>}]} {
    %c16_i32 = arith.constant 16 : i32
    %0 = arith.muli %arg1, %c16_i32 : i32
    %c0 = arith.constant 0 : index
    %c0_0 = arith.constant 0 : index
    %c0_1 = arith.constant 0 : index
    %c0_2 = arith.constant 0 : index
    %1 = vector.load %arg3[%c0, %c0_0, %c0_1, %c0_2] : memref<1x1x4x8xf32, #tpu.memory_space<vmem>>, vector<1x1x4x4xf32>
    %2 = vector.shape_cast %1 : vector<1x1x4x4xf32> to vector<4x4xf32>
    %c0_3 = arith.constant 0 : index
    %c124 = arith.constant 124 : index
    %3 = vector.load %arg11[%c0_3, %c124] : memref<4x148xf32, #tpu.memory_space<vmem>>, vector<4x4xf32>
    tpu.vector_store %arg11[%c0_3, %c124], %2 {strides = array<i32>} : memref<4x148xf32, #tpu.memory_space<vmem>>, vector<4x4xf32>,
    %c0_4 = arith.constant 0 : index
    %c0_5 = arith.constant 0 : index
    %c0_6 = arith.constant 0 : index
    %4 = vector.load %arg2[%c0_4, %c0_5, %c0_6] : memref<1x4x16xf32, #tpu.memory_space<vmem>>, vector<1x4x16xf32>
    %5 = vector.shape_cast %4 : vector<1x4x16xf32> to vector<4x16xf32>
    %c0_7 = arith.constant 0 : index
    %c128 = arith.constant 128 : index
    %6 = vector.load %arg11[%c0_7, %c128] : memref<4x148xf32, #tpu.memory_space<vmem>>, vector<4x16xf32>
    tpu.vector_store %arg11[%c0_7, %c128], %5 {strides = array<i32>} : memref<4x148xf32, #tpu.memory_space<vmem>>, vector<4x16xf32>,
    %c0_8 = arith.constant 0 : index
    %c0_9 = arith.constant 0 : index
    %c0_10 = arith.constant 0 : index
    %c4 = arith.constant 4 : index
    %7 = vector.load %arg3[%c0_8, %c0_9, %c0_10, %c4] : memref<1x1x4x8xf32, #tpu.memory_space<vmem>>, vector<1x1x4x4xf32>
    %8 = vector.shape_cast %7 : vector<1x1x4x4xf32> to vector<4x4xf32>
    %c0_11 = arith.constant 0 : index
    %c144 = arith.constant 144 : index
    %9 = vector.load %arg11[%c0_11, %c144] : memref<4x148xf32, #tpu.memory_space<vmem>>, vector<4x4xf32>
    tpu.vector_store %arg11[%c0_11, %c144], %8 {strides = array<i32>} : memref<4x148xf32, #tpu.memory_space<vmem>>, vector<4x4xf32>,
    %c16_i32_12 = arith.constant 16 : i32
    %10 = arith.addi %0, %c16_i32_12 : i32
    %c16_i32_13 = arith.constant 16 : i32
    %11 = arith.cmpi sgt, %10, %c16_i32_13 : i32
    %12 = arith.extui %11 : i1 to i32
    %c0_i32 = arith.constant 0 : i32
    %13 = arith.cmpi ne, %12, %c0_i32 : i32
    scf.if %13 {
      %72 = tpu.iota {dimensions = array<i32: 1>} : vector<1x16xi32>
      %c0_69 = arith.constant 0 : index
      %c128_70 = arith.constant 128 : index
      %73 = vector.load %arg11[%c0_69, %c128_70] : memref<4x148xf32, #tpu.memory_space<vmem>>, vector<4x16xf32>
      %c16_i32_71 = arith.constant 16 : i32
      %74 = arith.subi %c16_i32_71, %0 : i32
      %75 = vector.broadcast %74 : i32 to vector<1x16xi32>
      %76 = arith.cmpi slt, %72, %75 : vector<1x16xi32>
      %c0_i32_72 = arith.constant 0 : i32
      %77 = arith.sitofp %c0_i32_72 : i32 to f32
      %78 = vector.shape_cast %76 : vector<1x16xi1> to vector<1x16xi1>
      %79 = vector.broadcast %78 : vector<1x16xi1> to vector<4x16xi1>
      %80 = vector.broadcast %77 : f32 to vector<4x16xf32>
      %81 = arith.select %79, %73, %80 : vector<4x16xi1>, vector<4x16xf32>
      %c0_73 = arith.constant 0 : index
      %c128_74 = arith.constant 128 : index
      %82 = vector.load %arg11[%c0_73, %c128_74] : memref<4x148xf32, #tpu.memory_space<vmem>>, vector<4x16xf32>
      tpu.vector_store %arg11[%c0_73, %c128_74], %81 {strides = array<i32>} : memref<4x148xf32, #tpu.memory_space<vmem>>, vector<4x16xf32>,
    } else {
    }
    %c0_14 = arith.constant 0 : index
    %c0_15 = arith.constant 0 : index
    %c0_16 = arith.constant 0 : index
    %14 = vector.load %arg4[%c0_14, %c0_15, %c0_16] : memref<3x8x4xf32, #tpu.memory_space<vmem>>, vector<1x8x4xf32>
    %15 = vector.shape_cast %14 : vector<1x8x4xf32> to vector<8x4xf32>
    %c0_17 = arith.constant 0 : index
    %c124_18 = arith.constant 124 : index
    %16 = vector.load %arg11[%c0_17, %c124_18] : memref<4x148xf32, #tpu.memory_space<vmem>>, vector<4x20xf32>
    %cst = arith.constant dense<0.000000e+00> : vector<8x20xf32>
    %17 = tpu.matmul %15, %16, %cst {dimension_numbers = #tpu.dot_dimension_numbers<[1], [0], [0], [1], [0, 0, 1, 1], [], []>} : vector<8x4xf32>, vector<4x20xf32>, vector<8x20xf32> -> vector<8x20xf32>
    %c1 = arith.constant 1 : index
    %c0_19 = arith.constant 0 : index
    %c0_20 = arith.constant 0 : index
    %18 = vector.load %arg4[%c1, %c0_19, %c0_20] : memref<3x8x4xf32, #tpu.memory_space<vmem>>, vector<1x8x4xf32>
    %19 = vector.shape_cast %18 : vector<1x8x4xf32> to vector<8x4xf32>
    %c0_21 = arith.constant 0 : index
    %c126 = arith.constant 126 : index
    %20 = vector.load %arg11[%c0_21, %c126] : memref<4x148xf32, #tpu.memory_space<vmem>>, vector<4x20xf32>
    %cst_22 = arith.constant dense<0.000000e+00> : vector<8x20xf32>
    %21 = tpu.matmul %19, %20, %cst_22 {dimension_numbers = #tpu.dot_dimension_numbers<[1], [0], [0], [1], [0, 0, 1, 1], [], []>} : vector<8x4xf32>, vector<4x20xf32>, vector<8x20xf32> -> vector<8x20xf32>
    %22 = arith.addf %17, %21 : vector<8x20xf32>
    %c2 = arith.constant 2 : index
    %c0_23 = arith.constant 0 : index
    %c0_24 = arith.constant 0 : index
    %23 = vector.load %arg4[%c2, %c0_23, %c0_24] : memref<3x8x4xf32, #tpu.memory_space<vmem>>, vector<1x8x4xf32>
    %24 = vector.shape_cast %23 : vector<1x8x4xf32> to vector<8x4xf32>
    %c0_25 = arith.constant 0 : index
    %c128_26 = arith.constant 128 : index
    %25 = vector.load %arg11[%c0_25, %c128_26] : memref<4x148xf32, #tpu.memory_space<vmem>>, vector<4x20xf32>
    %cst_27 = arith.constant dense<0.000000e+00> : vector<8x20xf32>
    %26 = tpu.matmul %24, %25, %cst_27 {dimension_numbers = #tpu.dot_dimension_numbers<[1], [0], [0], [1], [0, 0, 1, 1], [], []>} : vector<8x4xf32>, vector<4x20xf32>, vector<8x20xf32> -> vector<8x20xf32>
    %27 = arith.addf %22, %26 : vector<8x20xf32>
    %c0_28 = arith.constant 0 : index
    %c0_29 = arith.constant 0 : index
    %28 = vector.load %arg5[%c0_28, %c0_29] : memref<8x1xf32, #tpu.memory_space<vmem>>, vector<8x1xf32>
    %29 = vector.broadcast %28 : vector<8x1xf32> to vector<8x20xf32>
    %30 = arith.addf %27, %29 : vector<8x20xf32>
    %cst_30 = arith.constant 0.000000e+00 : f32
    %31 = vector.broadcast %cst_30 : f32 to vector<8x20xf32>
    %32 = arith.maximumf %30, %31 : vector<8x20xf32>
    %c0_31 = arith.constant 0 : index
    %c0_32 = arith.constant 0 : index
    %33 = vector.load %arg12[%c0_31, %c0_32] : memref<8x20xf32, #tpu.memory_space<vmem>>, vector<8x20xf32>
    tpu.vector_store %arg12[%c0_31, %c0_32], %32 {strides = array<i32>} : memref<8x20xf32, #tpu.memory_space<vmem>>, vector<8x20xf32>,
    %c0_i32_33 = arith.constant 0 : i32
    %34 = arith.cmpi eq, %arg1, %c0_i32_33 : i32
    %c16_i32_34 = arith.constant 16 : i32
    %35 = arith.addi %0, %c16_i32_34 : i32
    %c2_i32 = arith.constant 2 : i32
    %36 = arith.addi %35, %c2_i32 : i32
    %c16_i32_35 = arith.constant 16 : i32
    %37 = arith.cmpi sgt, %36, %c16_i32_35 : i32
    %38 = arith.ori %34, %37 : i1
    %39 = arith.extui %38 : i1 to i32
    %c0_i32_36 = arith.constant 0 : i32
    %40 = arith.cmpi ne, %39, %c0_i32_36 : i32
    scf.if %40 {
      %c2_i32_69 = arith.constant 2 : i32
      %72 = arith.subi %0, %c2_i32_69 : i32
      %73 = tpu.iota {dimensions = array<i32: 1>} : vector<1x20xi32>
      %74 = vector.broadcast %72 : i32 to vector<1x20xi32>
      %75 = arith.addi %74, %73 : vector<1x20xi32>
      %c0_i32_70 = arith.constant 0 : i32
      %76 = vector.broadcast %c0_i32_70 : i32 to vector<1x20xi32>
      %77 = arith.cmpi sge, %75, %76 : vector<1x20xi32>
      %c16_i32_71 = arith.constant 16 : i32
      %78 = vector.broadcast %c16_i32_71 : i32 to vector<1x20xi32>
      %79 = arith.cmpi slt, %75, %78 : vector<1x20xi32>
      %80 = arith.andi %77, %79 : vector<1x20xi1>
      %c0_72 = arith.constant 0 : index
      %c0_73 = arith.constant 0 : index
      %81 = vector.load %arg12[%c0_72, %c0_73] : memref<8x20xf32, #tpu.memory_space<vmem>>, vector<8x20xf32>
      %c0_i32_74 = arith.constant 0 : i32
      %82 = arith.sitofp %c0_i32_74 : i32 to f32
      %83 = vector.shape_cast %80 : vector<1x20xi1> to vector<1x20xi1>
      %84 = vector.broadcast %83 : vector<1x20xi1> to vector<8x20xi1>
      %85 = vector.broadcast %82 : f32 to vector<8x20xf32>
      %86 = arith.select %84, %81, %85 : vector<8x20xi1>, vector<8x20xf32>
      %c0_75 = arith.constant 0 : index
      %c0_76 = arith.constant 0 : index
      %87 = vector.load %arg12[%c0_75, %c0_76] : memref<8x20xf32, #tpu.memory_space<vmem>>, vector<8x20xf32>
      tpu.vector_store %arg12[%c0_75, %c0_76], %86 {strides = array<i32>} : memref<8x20xf32, #tpu.memory_space<vmem>>, vector<8x20xf32>,
    } else {
    }
    %c0_37 = arith.constant 0 : index
    %c0_38 = arith.constant 0 : index
    %c0_39 = arith.constant 0 : index
    %41 = vector.load %arg6[%c0_37, %c0_38, %c0_39] : memref<3x8x8xf32, #tpu.memory_space<vmem>>, vector<1x8x8xf32>
    %42 = vector.shape_cast %41 : vector<1x8x8xf32> to vector<8x8xf32>
    %c0_40 = arith.constant 0 : index
    %c0_41 = arith.constant 0 : index
    %43 = vector.load %arg12[%c0_40, %c0_41] : memref<8x20xf32, #tpu.memory_space<vmem>>, vector<8x16xf32>
    %cst_42 = arith.constant dense<0.000000e+00> : vector<8x16xf32>
    %44 = tpu.matmul %42, %43, %cst_42 {dimension_numbers = #tpu.dot_dimension_numbers<[1], [0], [0], [1], [0, 0, 1, 1], [], []>} : vector<8x8xf32>, vector<8x16xf32>, vector<8x16xf32> -> vector<8x16xf32>
    %c1_43 = arith.constant 1 : index
    %c0_44 = arith.constant 0 : index
    %c0_45 = arith.constant 0 : index
    %45 = vector.load %arg6[%c1_43, %c0_44, %c0_45] : memref<3x8x8xf32, #tpu.memory_space<vmem>>, vector<1x8x8xf32>
    %46 = vector.shape_cast %45 : vector<1x8x8xf32> to vector<8x8xf32>
    %c0_46 = arith.constant 0 : index
    %c2_47 = arith.constant 2 : index
    %47 = vector.load %arg12[%c0_46, %c2_47] : memref<8x20xf32, #tpu.memory_space<vmem>>, vector<8x16xf32>
    %cst_48 = arith.constant dense<0.000000e+00> : vector<8x16xf32>
    %48 = tpu.matmul %46, %47, %cst_48 {dimension_numbers = #tpu.dot_dimension_numbers<[1], [0], [0], [1], [0, 0, 1, 1], [], []>} : vector<8x8xf32>, vector<8x16xf32>, vector<8x16xf32> -> vector<8x16xf32>
    %49 = arith.addf %44, %48 : vector<8x16xf32>
    %c2_49 = arith.constant 2 : index
    %c0_50 = arith.constant 0 : index
    %c0_51 = arith.constant 0 : index
    %50 = vector.load %arg6[%c2_49, %c0_50, %c0_51] : memref<3x8x8xf32, #tpu.memory_space<vmem>>, vector<1x8x8xf32>
    %51 = vector.shape_cast %50 : vector<1x8x8xf32> to vector<8x8xf32>
    %c0_52 = arith.constant 0 : index
    %c4_53 = arith.constant 4 : index
    %52 = vector.load %arg12[%c0_52, %c4_53] : memref<8x20xf32, #tpu.memory_space<vmem>>, vector<8x16xf32>
    %cst_54 = arith.constant dense<0.000000e+00> : vector<8x16xf32>
    %53 = tpu.matmul %51, %52, %cst_54 {dimension_numbers = #tpu.dot_dimension_numbers<[1], [0], [0], [1], [0, 0, 1, 1], [], []>} : vector<8x8xf32>, vector<8x16xf32>, vector<8x16xf32> -> vector<8x16xf32>
    %54 = arith.addf %49, %53 : vector<8x16xf32>
    %c0_55 = arith.constant 0 : index
    %c0_56 = arith.constant 0 : index
    %55 = vector.load %arg7[%c0_55, %c0_56] : memref<8x1xf32, #tpu.memory_space<vmem>>, vector<8x1xf32>
    %56 = vector.broadcast %55 : vector<8x1xf32> to vector<8x16xf32>
    %57 = arith.addf %54, %56 : vector<8x16xf32>
    %cst_57 = arith.constant 0.000000e+00 : f32
    %58 = vector.broadcast %cst_57 : f32 to vector<8x16xf32>
    %59 = arith.maximumf %57, %58 : vector<8x16xf32>
    %c0_58 = arith.constant 0 : index
    %c128_59 = arith.constant 128 : index
    %60 = vector.load %arg11[%c0_58, %c128_59] : memref<4x148xf32, #tpu.memory_space<vmem>>, vector<4x16xf32>
    %c0_60 = arith.constant 0 : index
    %c0_61 = arith.constant 0 : index
    %61 = vector.load %arg8[%c0_60, %c0_61] : memref<8x4xf32, #tpu.memory_space<vmem>>, vector<8x4xf32>
    %cst_62 = arith.constant dense<0.000000e+00> : vector<8x16xf32>
    %62 = tpu.matmul %61, %60, %cst_62 {dimension_numbers = #tpu.dot_dimension_numbers<[1], [0], [0], [1], [0, 0, 1, 1], [], []>} : vector<8x4xf32>, vector<4x16xf32>, vector<8x16xf32> -> vector<8x16xf32>
    %c0_63 = arith.constant 0 : index
    %c0_64 = arith.constant 0 : index
    %63 = vector.load %arg9[%c0_63, %c0_64] : memref<8x1xf32, #tpu.memory_space<vmem>>, vector<8x1xf32>
    %64 = vector.broadcast %63 : vector<8x1xf32> to vector<8x16xf32>
    %65 = arith.addf %62, %64 : vector<8x16xf32>
    %66 = arith.addf %59, %65 : vector<8x16xf32>
    %cst_65 = arith.constant 0.000000e+00 : f32
    %67 = vector.broadcast %cst_65 : f32 to vector<8x16xf32>
    %68 = arith.maximumf %66, %67 : vector<8x16xf32>
    %c0_66 = arith.constant 0 : index
    %c0_67 = arith.constant 0 : index
    %c0_68 = arith.constant 0 : index
    %69 = vector.load %arg10[%c0_66, %c0_67, %c0_68] : memref<1x8x16xf32, #tpu.memory_space<vmem>>, vector<1x8x16xf32>
    %70 = vector.shape_cast %69 : vector<1x8x16xf32> to vector<8x16xf32>
    %71 = vector.shape_cast %68 : vector<8x16xf32> to vector<1x8x16xf32>
    tpu.vector_store %arg10[%c0_66, %c0_67, %c0_68], %71 {strides = array<i32>} : memref<1x8x16xf32, #tpu.memory_space<vmem>>, vector<1x8x16xf32>,
    return
  }
  func.func @transform_0(%arg0: i32, %arg1: i32) -> (i32, i32, i32) {
    %c0_i32 = arith.constant 0 : i32
    %c0_i32_0 = arith.constant 0 : i32
    return %arg0, %c0_i32, %arg1 : i32, i32, i32
  }
  func.func @transform_1(%arg0: i32, %arg1: i32) -> (i32, i32, i32, i32) {
    %c0_i32 = arith.constant 0 : i32
    %c0_i32_0 = arith.constant 0 : i32
    %c0_i32_1 = arith.constant 0 : i32
    return %arg0, %arg1, %c0_i32, %c0_i32_0 : i32, i32, i32, i32
  }
  func.func @transform_2(%arg0: i32, %arg1: i32) -> (i32, i32, i32) {
    %c0_i32 = arith.constant 0 : i32
    %c0_i32_0 = arith.constant 0 : i32
    %c0_i32_1 = arith.constant 0 : i32
    %c0_i32_2 = arith.constant 0 : i32
    return %c0_i32, %c0_i32_0, %c0_i32_1 : i32, i32, i32
  }
  func.func @transform_3(%arg0: i32, %arg1: i32) -> (i32, i32) {
    %c0_i32 = arith.constant 0 : i32
    %c0_i32_0 = arith.constant 0 : i32
    %c0_i32_1 = arith.constant 0 : i32
    return %c0_i32, %c0_i32_0 : i32, i32
  }
  func.func @transform_4(%arg0: i32, %arg1: i32) -> (i32, i32, i32) {
    %c0_i32 = arith.constant 0 : i32
    %c0_i32_0 = arith.constant 0 : i32
    %c0_i32_1 = arith.constant 0 : i32
    %c0_i32_2 = arith.constant 0 : i32
    return %c0_i32, %c0_i32_0, %c0_i32_1 : i32, i32, i32
  }
  func.func @transform_5(%arg0: i32, %arg1: i32) -> (i32, i32) {
    %c0_i32 = arith.constant 0 : i32
    %c0_i32_0 = arith.constant 0 : i32
    %c0_i32_1 = arith.constant 0 : i32
    return %c0_i32, %c0_i32_0 : i32, i32
  }
  func.func @transform_6(%arg0: i32, %arg1: i32) -> (i32, i32) {
    %c0_i32 = arith.constant 0 : i32
    %c0_i32_0 = arith.constant 0 : i32
    %c0_i32_1 = arith.constant 0 : i32
    return %c0_i32, %c0_i32_0 : i32, i32
  }
  func.func @transform_7(%arg0: i32, %arg1: i32) -> (i32, i32) {
    %c0_i32 = arith.constant 0 : i32
    %c0_i32_0 = arith.constant 0 : i32
    %c0_i32_1 = arith.constant 0 : i32
    return %c0_i32, %c0_i32_0 : i32, i32
  }
  func.func @transform_8(%arg0: i32, %arg1: i32) -> (i32, i32, i32) {
    %c0_i32 = arith.constant 0 : i32
    %c0_i32_0 = arith.constant 0 : i32
    return %arg0, %c0_i32, %arg1 : i32, i32, i32
  }
}

</mosaic_0001>

<llo_original>
// kernel: tpu_custom_call.1
$region0: #{tpu_custom_call.1}
  #allocation0 [shape = 'u32[]', space=smem, size = 0x4, offset = 0x4, fixed_abs, tag = 'smem constant byte address 0x4 - core index']
  #allocation1 [shape = 'u32[144,128]{1,0:T(1,128)}', space=vmem, size = 0x12000, scoped, tag = 'internal scratch']
  #allocation2 [shape = 'f32[4,148]{1,0:T(4,128)}', space=vmem, size = 0x1000, scoped, tag = 'scratch operand']
  #allocation3 [shape = 'f32[8,20]{1,0:T(8,128)}', space=vmem, size = 0x1000, scoped, tag = 'scratch operand']
  %s0 = inlined_call_operand.vmem [shape: f32[2,4,16], index: 0, kind: input, shape index: {}]
  %s1 = inlined_call_operand.vmem [shape: f32[2,1,4,8], index: 1, kind: input, shape index: {}]
  %s2 = inlined_call_operand.vmem [shape: f32[3,8,4], index: 2, kind: input, shape index: {}]
  %s3 = inlined_call_operand.vmem [shape: f32[8,1], index: 3, kind: input, shape index: {}]
  %s4 = inlined_call_operand.vmem [shape: f32[3,8,8], index: 4, kind: input, shape index: {}]
  %s5 = inlined_call_operand.vmem [shape: f32[8,1], index: 5, kind: input, shape index: {}]
  %s6 = inlined_call_operand.vmem [shape: f32[8,4], index: 6, kind: input, shape index: {}]
  %s7 = inlined_call_operand.vmem [shape: f32[8,1], index: 7, kind: input, shape index: {}]
  %s8 = inlined_call_operand.hbm [shape: f32[2,8,16], index: 8, kind: output, shape index: {}]
  %s9 = sld [smem:[#allocation0]]
  $region73: #{tpu_custom_call.1} parent=0
    _
  %s11 = ssub.s32 1, %s9
  %s12 = scalar_select 0, %s11, %s9
  $region1: #{tpu_custom_call.1} parent=0
    #allocation4 [shape = 'u8[8192]{0}', space=vmem, size = 0x2000, scoped, tag = 'output window, operand 0']
    #allocation5 [shape = 's32[2]{0}', space=sflag, size = 0x8, scoped, tag = 'scoped memory for tpu_custom_call.1']
    %13 = vsyncpa [#allocation5], 0
    %s14 = scalar_lea.sflag [#allocation5], 1
    %15 = vsyncpa %s14, 0
    loop: start=0, step=1, limit=4
    $region2: #{tpu_custom_call.1} parent=1 // loop_pre_header
      _
    $region3: #{tpu_custom_call.1} parent=1 // loop_header
      %s17 = sphi 0, %s21
      %p18 = scmp.ge.s32.totalorder %s17, 4
      %s24 = sphi 0, %s36
      %s25 = sphi 0, %s32
      %s26 = sphi 0, %s24
      %s27 = sphi 0, %s25
      %s28 = sphi 0, %s26
      %s29 = sphi 0, %s27
      %s41 = sphi 0, %s43
      %s44 = sphi 0, %s41
      %s45 = sphi 0, %s44
      %s61 = sphi 0, %s45
      %s69 = sphi 0, %s71
      %s72 = sphi 0, %s69
      %s73 = sphi 0, %s72
      %s89 = sphi 0, %s73
      %s93 = sphi 0, %s93
      %s95 = sphi 0, %s93
      %s96 = sphi 0, %s95
      %s110 = sphi 0, %s96
      %s114 = sphi 0, %s114
      %s116 = sphi 0, %s114
      %s117 = sphi 0, %s116
      %s131 = sphi 0, %s117
      %s135 = sphi 0, %s135
      %s137 = sphi 0, %s135
      %s138 = sphi 0, %s137
      %s152 = sphi 0, %s138
      %s156 = sphi 0, %s156
      %s158 = sphi 0, %s156
      %s159 = sphi 0, %s158
      %s173 = sphi 0, %s159
      %s177 = sphi 0, %s177
      %s179 = sphi 0, %s177
      %s180 = sphi 0, %s179
      %s194 = sphi 0, %s180
      %s198 = sphi 0, %s198
      %s200 = sphi 0, %s198
      %s201 = sphi 0, %s200
      %s215 = sphi 0, %s201
      %s223 = sphi 0, %s225
      %s226 = sphi 0, %s223
      %s227 = sphi 0, %s226
      %s243 = sphi 0, %s227
    $region4: #{tpu_custom_call.1} parent=1 // loop_header_branch
      %20 = sbr.rel (%p18) target = $region8
    $region5: #{tpu_custom_call.1} parent=1 // loop_body
      %s22 = ssub.s32 %s17, 1
      %s23 = ssub.s32 %s17, 2
      %s30 = sadd.s32 1, %s25
      %p31 = scmp.ge.s32.totalorder %s30, 1
      %s32 = scalar_select %p31, 0, %s30
      %s33 = sadd.s32 1, %s24
      %s34 = scalar_select %p31, %s33, %s24
      %p35 = scmp.ge.s32.totalorder %s34, 2
      %s36 = scalar_select %p35, 0, %s34
      %s37 = ssub.s32 %s24, %s36
      %s38 = ssub.s32 %s25, %s32
      %s39 = sor.u32 %s37, %s38
      %p40 = scmp.eq.s32.totalorder %s39, 0
      %s42 = sadd.s32 %s41, 1
      %s43 = scalar_select %p40, %s41, %s42
      %p46 = pneg %p40
      %p47 = scmp.eq.s32.totalorder %s17, 1
      %p48 = por %p46, %p47
      %p49 = scmp.ne.s32.totalorder %s41, %s44
      %p50 = scmp.eq.s32.totalorder %s17, 0
      %p51 = por %p49, %p50
      %p52 = scmp.ne.s32.totalorder %s41, %s44
      %p53 = scmp.eq.s32.totalorder %s22, 1
      %p54 = por %p52, %p53
      %p55 = scmp.ne.s32.totalorder %s44, %s45
      %p56 = scmp.eq.s32.totalorder %s22, 0
      %p57 = por %p55, %p56
      %p58 = scmp.ne.s32.totalorder %s44, %s45
      %p59 = scmp.eq.s32.totalorder %s23, 1
      %p60 = por %p58, %p59
      %p62 = scmp.ne.s32.totalorder %s45, %s61
      %p63 = scmp.eq.s32.totalorder %s23, 0
      %p64 = por %p62, %p63
      %s65 = ssub.s32 %s24, %s36
      %s66 = ssub.s32 %s25, %s32
      %s67 = sor.u32 %s65, %s66
      %p68 = scmp.eq.s32.totalorder %s67, 0
      %s70 = sadd.s32 %s69, 1
      %s71 = scalar_select %p68, %s69, %s70
      %p74 = pneg %p68
      %p75 = scmp.eq.s32.totalorder %s17, 1
      %p76 = por %p74, %p75
      %p77 = scmp.ne.s32.totalorder %s69, %s72
      %p78 = scmp.eq.s32.totalorder %s17, 0
      %p79 = por %p77, %p78
      %p80 = scmp.ne.s32.totalorder %s69, %s72
      %p81 = scmp.eq.s32.totalorder %s22, 1
      %p82 = por %p80, %p81
      %p83 = scmp.ne.s32.totalorder %s72, %s73
      %p84 = scmp.eq.s32.totalorder %s22, 0
      %p85 = por %p83, %p84
      %p86 = scmp.ne.s32.totalorder %s72, %s73
      %p87 = scmp.eq.s32.totalorder %s23, 1
      %p88 = por %p86, %p87
      %p90 = scmp.ne.s32.totalorder %s73, %s89
      %p91 = scmp.eq.s32.totalorder %s23, 0
      %p92 = por %p90, %p91
      %s94 = sadd.s32 %s93, 1
      %p97 = scmp.eq.s32.totalorder %s17, 1
      %p98 = scmp.ne.s32.totalorder %s93, %s95
      %p99 = scmp.eq.s32.totalorder %s17, 0
      %p100 = por %p98, %p99
      %p101 = scmp.ne.s32.totalorder %s93, %s95
      %p102 = scmp.eq.s32.totalorder %s22, 1
      %p103 = por %p101, %p102
      %p104 = scmp.ne.s32.totalorder %s95, %s96
      %p105 = scmp.eq.s32.totalorder %s22, 0
      %p106 = por %p104, %p105
      %p107 = scmp.ne.s32.totalorder %s95, %s96
      %p108 = scmp.eq.s32.totalorder %s23, 1
      %p109 = por %p107, %p108
      %p111 = scmp.ne.s32.totalorder %s96, %s110
      %p112 = scmp.eq.s32.totalorder %s23, 0
      %p113 = por %p111, %p112
      %s115 = sadd.s32 %s114, 1
      %p118 = scmp.eq.s32.totalorder %s17, 1
      %p119 = scmp.ne.s32.totalorder %s114, %s116
      %p120 = scmp.eq.s32.totalorder %s17, 0
      %p121 = por %p119, %p120
      %p122 = scmp.ne.s32.totalorder %s114, %s116
      %p123 = scmp.eq.s32.totalorder %s22, 1
      %p124 = por %p122, %p123
      %p125 = scmp.ne.s32.totalorder %s116, %s117
      %p126 = scmp.eq.s32.totalorder %s22, 0
      %p127 = por %p125, %p126
      %p128 = scmp.ne.s32.totalorder %s116, %s117
      %p129 = scmp.eq.s32.totalorder %s23, 1
      %p130 = por %p128, %p129
      %p132 = scmp.ne.s32.totalorder %s117, %s131
      %p133 = scmp.eq.s32.totalorder %s23, 0
      %p134 = por %p132, %p133
      %s136 = sadd.s32 %s135, 1
      %p139 = scmp.eq.s32.totalorder %s17, 1
      %p140 = scmp.ne.s32.totalorder %s135, %s137
      %p141 = scmp.eq.s32.totalorder %s17, 0
      %p142 = por %p140, %p141
      %p143 = scmp.ne.s32.totalorder %s135, %s137
      %p144 = scmp.eq.s32.totalorder %s22, 1
      %p145 = por %p143, %p144
      %p146 = scmp.ne.s32.totalorder %s137, %s138
      %p147 = scmp.eq.s32.totalorder %s22, 0
      %p148 = por %p146, %p147
      %p149 = scmp.ne.s32.totalorder %s137, %s138
      %p150 = scmp.eq.s32.totalorder %s23, 1
      %p151 = por %p149, %p150
      %p153 = scmp.ne.s32.totalorder %s138, %s152
      %p154 = scmp.eq.s32.totalorder %s23, 0
      %p155 = por %p153, %p154
      %s157 = sadd.s32 %s156, 1
      %p160 = scmp.eq.s32.totalorder %s17, 1
      %p161 = scmp.ne.s32.totalorder %s156, %s158
      %p162 = scmp.eq.s32.totalorder %s17, 0
      %p163 = por %p161, %p162
      %p164 = scmp.ne.s32.totalorder %s156, %s158
      %p165 = scmp.eq.s32.totalorder %s22, 1
      %p166 = por %p164, %p165
      %p167 = scmp.ne.s32.totalorder %s158, %s159
      %p168 = scmp.eq.s32.totalorder %s22, 0
      %p169 = por %p167, %p168
      %p170 = scmp.ne.s32.totalorder %s158, %s159
      %p171 = scmp.eq.s32.totalorder %s23, 1
      %p172 = por %p170, %p171
      %p174 = scmp.ne.s32.totalorder %s159, %s173
      %p175 = scmp.eq.s32.totalorder %s23, 0
      %p176 = por %p174, %p175
      %s178 = sadd.s32 %s177, 1
      %p181 = scmp.eq.s32.totalorder %s17, 1
      %p182 = scmp.ne.s32.totalorder %s177, %s179
      %p183 = scmp.eq.s32.totalorder %s17, 0
      %p184 = por %p182, %p183
      %p185 = scmp.ne.s32.totalorder %s177, %s179
      %p186 = scmp.eq.s32.totalorder %s22, 1
      %p187 = por %p185, %p186
      %p188 = scmp.ne.s32.totalorder %s179, %s180
      %p189 = scmp.eq.s32.totalorder %s22, 0
      %p190 = por %p188, %p189
      %p191 = scmp.ne.s32.totalorder %s179, %s180
      %p192 = scmp.eq.s32.totalorder %s23, 1
      %p193 = por %p191, %p192
      %p195 = scmp.ne.s32.totalorder %s180, %s194
      %p196 = scmp.eq.s32.totalorder %s23, 0
      %p197 = por %p195, %p196
      %s199 = sadd.s32 %s198, 1
      %p202 = scmp.eq.s32.totalorder %s17, 1
      %p203 = scmp.ne.s32.totalorder %s198, %s200
      %p204 = scmp.eq.s32.totalorder %s17, 0
      %p205 = por %p203, %p204
      %p206 = scmp.ne.s32.totalorder %s198, %s200
      %p207 = scmp.eq.s32.totalorder %s22, 1
      %p208 = por %p206, %p207
      %p209 = scmp.ne.s32.totalorder %s200, %s201
      %p210 = scmp.eq.s32.totalorder %s22, 0
      %p211 = por %p209, %p210
      %p212 = scmp.ne.s32.totalorder %s200, %s201
      %p213 = scmp.eq.s32.totalorder %s23, 1
      %p214 = por %p212, %p213
      %p216 = scmp.ne.s32.totalorder %s201, %s215
      %p217 = scmp.eq.s32.totalorder %s23, 0
      %p218 = por %p216, %p217
      %s219 = ssub.s32 %s24, %s36
      %s220 = ssub.s32 %s25, %s32
      %s221 = sor.u32 %s219, %s220
      %p222 = scmp.eq.s32.totalorder %s221, 0
      %s224 = sadd.s32 %s223, 1
      %s225 = scalar_select %p222, %s223, %s224
      %p228 = pneg %p222
      %p229 = scmp.eq.s32.totalorder %s17, 1
      %p230 = por %p228, %p229
      %p231 = scmp.ne.s32.totalorder %s223, %s226
      %p232 = scmp.eq.s32.totalorder %s17, 0
      %p233 = por %p231, %p232
      %p234 = scmp.ne.s32.totalorder %s223, %s226
      %p235 = scmp.eq.s32.totalorder %s22, 1
      %p236 = por %p234, %p235
      %p237 = scmp.ne.s32.totalorder %s226, %s227
      %p238 = scmp.eq.s32.totalorder %s22, 0
      %p239 = por %p237, %p238
      %p240 = scmp.ne.s32.totalorder %s226, %s227
      %p241 = scmp.eq.s32.totalorder %s23, 1
      %p242 = por %p240, %p241
      %p244 = scmp.ne.s32.totalorder %s227, %s243
      %p245 = scmp.eq.s32.totalorder %s23, 0
      %p246 = por %p244, %p245
      %p247 = scmp.le.s32.totalorder 1, %s17
      %p248 = scmp.lt.s32.totalorder %s17, 3
      %p249 = pnand %p247, %p248
      %p250 = pneg %p249
      // Predicated region
      $region9: #{tpu_custom_call.1} parent=5 // pred_check
        _
      $region10: #{tpu_custom_call.1} parent=5 // pred_check_branch
        %252 = sbr.rel (%p249) target = $region12
      $region11: #{tpu_custom_call.1} parent=5 // pred_region
        %s253 = ssub.s32 %s17, 1
        // Predicated region
        $region13: #{tpu_custom_call.1} parent=11 // pred_check
          %p254 = pneg %p106
        $region14: #{tpu_custom_call.1} parent=11 // pred_check_branch
          %256 = sbr.rel (%p254) target = $region16
        $region15: #{tpu_custom_call.1} parent=11 // pred_region
          _
        $region16: #{tpu_custom_call.1} parent=11 // pred_fallthru
          _
        // Predicated region
        $region17: #{tpu_custom_call.1} parent=11 // pred_check
          %p257 = pneg %p127
        $region18: #{tpu_custom_call.1} parent=11 // pred_check_branch
          %259 = sbr.rel (%p257) target = $region20
        $region19: #{tpu_custom_call.1} parent=11 // pred_region
          _
        $region20: #{tpu_custom_call.1} parent=11 // pred_fallthru
          _
        // Predicated region
        $region21: #{tpu_custom_call.1} parent=11 // pred_check
          %p260 = pneg %p148
        $region22: #{tpu_custom_call.1} parent=11 // pred_check_branch
          %262 = sbr.rel (%p260) target = $region24
        $region23: #{tpu_custom_call.1} parent=11 // pred_region
          _
        $region24: #{tpu_custom_call.1} parent=11 // pred_fallthru
          _
        // Predicated region
        $region25: #{tpu_custom_call.1} parent=11 // pred_check
          %p263 = pneg %p169
        $region26: #{tpu_custom_call.1} parent=11 // pred_check_branch
          %265 = sbr.rel (%p263) target = $region28
        $region27: #{tpu_custom_call.1} parent=11 // pred_region
          _
        $region28: #{tpu_custom_call.1} parent=11 // pred_fallthru
          _
        // Predicated region
        $region29: #{tpu_custom_call.1} parent=11 // pred_check
          %p266 = pneg %p190
        $region30: #{tpu_custom_call.1} parent=11 // pred_check_branch
          %268 = sbr.rel (%p266) target = $region32
        $region31: #{tpu_custom_call.1} parent=11 // pred_region
          _
        $region32: #{tpu_custom_call.1} parent=11 // pred_fallthru
          _
        // Predicated region
        $region33: #{tpu_custom_call.1} parent=11 // pred_check
          %p269 = pneg %p211
        $region34: #{tpu_custom_call.1} parent=11 // pred_check_branch
          %271 = sbr.rel (%p269) target = $region36
        $region35: #{tpu_custom_call.1} parent=11 // pred_region
          _
        $region36: #{tpu_custom_call.1} parent=11 // pred_fallthru
          _
      $region12: #{tpu_custom_call.1} parent=5 // pred_fallthru
        _
      %p272 = scmp.lt.s32.totalorder %s17, 2
      // Predicated region
      $region37: #{tpu_custom_call.1} parent=5 // pred_check
        %p273 = pneg %p272
      $region38: #{tpu_custom_call.1} parent=5 // pred_check_branch
        %275 = sbr.rel (%p273) target = $region40
      $region39: #{tpu_custom_call.1} parent=5 // pred_region
        // Predicated region
        $region41: #{tpu_custom_call.1} parent=39 // pred_check
          %p276 = pneg %p51
        $region42: #{tpu_custom_call.1} parent=39 // pred_check_branch
          %278 = sbr.rel (%p276) target = $region44
        $region43: #{tpu_custom_call.1} parent=39 // pred_region
          %p279 = scmp.lt.s32.totalorder %s24, 1
          %s280 = scalar_select %p279, %s24, 1
          %p281 = scmp.lt.s32.totalorder %s25, 0
          %s282 = scalar_select %p281, %s25, 0
          %s283 = sadd.s32 %s282, %s280
          %s284 = smul.addr %s283, 4
          %s285 = scalar_lea.vmem %s0, %s284
        $region44: #{tpu_custom_call.1} parent=39 // pred_fallthru
          _
        // Predicated region
        $region45: #{tpu_custom_call.1} parent=39 // pred_check
          %p286 = pneg %p79
        $region46: #{tpu_custom_call.1} parent=39 // pred_check_branch
          %288 = sbr.rel (%p286) target = $region48
        $region47: #{tpu_custom_call.1} parent=39 // pred_region
          %p289 = scmp.lt.s32.totalorder %s24, 1
          %s290 = scalar_select %p289, %s24, 1
          %p291 = scmp.lt.s32.totalorder %s25, 0
          %s292 = scalar_select %p291, %s25, 0
          %s293 = sadd.s32 %s292, %s290
          %s294 = smul.addr %s293, 4
          %s295 = scalar_lea.vmem %s1, %s294
        $region48: #{tpu_custom_call.1} parent=39 // pred_fallthru
          _
      $region40: #{tpu_custom_call.1} parent=5 // pred_fallthru
        _
      %p296 = scmp.le.s32.totalorder 1, %s17
      %p297 = scmp.lt.s32.totalorder %s17, 3
      %p298 = pnand %p296, %p297
      %p299 = pneg %p298
      // Predicated region
      $region49: #{tpu_custom_call.1} parent=5 // pred_check
        _
      $region50: #{tpu_custom_call.1} parent=5 // pred_check_branch
        %301 = sbr.rel (%p298) target = $region52
      $region51: #{tpu_custom_call.1} parent=5 // pred_region
        %s302 = ssub.s32 %s17, 1
        %p303 = scmp.lt.s32.totalorder %s26, 1
        %s304 = scalar_select %p303, %s26, 1
        %p305 = scmp.lt.s32.totalorder %s27, 0
        %s306 = scalar_select %p305, %s27, 0
        %s307 = sadd.s32 %s306, %s304
        %s308 = smul.addr %s307, 4
        %s309 = scalar_lea.vmem %s0, %s308
        %p310 = pneg %p57
        %p311 = pneg %p54
        %p312 = scmp.lt.s32.totalorder %s26, 1
        %s313 = scalar_select %p312, %s26, 1
        %p314 = scmp.lt.s32.totalorder %s27, 0
        %s315 = scalar_select %p314, %s27, 0
        %s316 = sadd.s32 %s315, %s313
        %s317 = smul.addr %s316, 4
        %s318 = scalar_lea.vmem %s1, %s317
        %p319 = pneg %p85
        %p320 = pneg %p82
        %p321 = pneg %p106
        %p322 = pneg %p103
        %p323 = pneg %p127
        %p324 = pneg %p124
        %p325 = pneg %p148
        %p326 = pneg %p145
        %p327 = pneg %p169
        %p328 = pneg %p166
        %p329 = pneg %p190
        %p330 = pneg %p187
        %p331 = pneg %p211
        %p332 = pneg %p208
        %p333 = pneg %p239
        %p334 = pneg %p236
        %s335 = sand.u32 %s226, 1
        %s336 = scalar_lea.sflag [#allocation5], %s335
        %s337 = sand.u32 %s226, 1
        %s338 = smul.addr %s337, 8
        %s339 = scalar_lea.vmem [#allocation4], %s338
        %p340 = scmp.lt.s32.totalorder %s26, 1
        %s341 = scalar_select %p340, %s26, 1
        %p342 = scmp.lt.s32.totalorder %s27, 0
        %s343 = scalar_select %p342, %s27, 0
        %s344 = sadd.s32 %s343, %s341
        %s345 = smul.addr %s344, 4
        %s346 = scalar_lea.vmem %s0, %s345
        %p347 = scmp.lt.s32.totalorder %s26, 1
        %s348 = scalar_select %p347, %s26, 1
        %p349 = scmp.lt.s32.totalorder %s27, 0
        %s350 = scalar_select %p349, %s27, 0
        %s351 = sadd.s32 %s350, %s348
        %s352 = smul.addr %s351, 4
        %s353 = scalar_lea.vmem %s1, %s352
        %s354 = smul.u32 %s27, 16
        %v355 = vld [vmem:[%s353] sm:$0xf]
        %357 = vrot.lane.b32.xlu0 %v355, 124
        %v358 = vpop.permute.xlu0 %357
        %vm360 = vcmask 1044448
        %361 = vst.msk [vmem:[#allocation2] sm:$0xf] %vm360, %v358
        %v362 = vld [vmem:[%s346] sm:$0xf]
        %vm363 = vcmask 125952
        %364 = vst.msk [vmem:[#allocation2 + $0x4] sm:$0xf] %vm363, %v362
        %v365 = vld [vmem:[%s353] sm:$0xf]
        %367 = vrot.lane.b32.xlu0 %v365, 12
        %v368 = vpop.permute.xlu0 %367
        %vm370 = vcmask 158848
        %371 = vst.msk [vmem:[#allocation2 + $0x4] sm:$0xf] %vm370, %v368
        %s372 = sadd.s32 %s354, 16
        %p373 = scmp.gt.s32.totalorder %s372, 16
        // Predicated region
        $region53: #{tpu_custom_call.1} parent=51 // pred_check
          %p374 = pneg %p373
        $region54: #{tpu_custom_call.1} parent=51 // pred_check_branch
          %376 = sbr.rel (%p374) target = $region56
        $region55: #{tpu_custom_call.1} parent=51 // pred_region
          %v377 = vlaneseq
          %v378 = vand.u32 %v377, 127
          %v379 = vld [vmem:[#allocation2 + $0x4] sm:$0xf]
          %s380 = ssub.s32 16, %s354
          %v381 = vstv %s380
          %vm382 = vcmp.lt.s32.totalorder %v378, %v381
          %v383 = vsel %vm382, 1, 0
          %vm384 = vcmp.eq.s32.totalorder %v383, 1
          %v385 = vsel %vm384, %v379, 0.0
          %386 = vst.msk [vmem:[#allocation2 + $0x4] sm:$0xf] %vm363, %v385
        $region56: #{tpu_custom_call.1} parent=51 // pred_fallthru
          _
        %v387 = vld [vmem:[%s2] sm:$0xff]
        %v388 = vld [vmem:[#allocation2] sm:$0xff]
        %s389 = scalar_lea.vmem %s2, 8
        %v390 = vld [vmem:[%s389] sm:$0xff]
        %v392 = vcombine.high %v388, %v388
        %393 = vrot.lane.b32.xlu0 %v388, 2
        %v394 = vpop.permute.xlu0 %393
        %395 = vrot.lane.b32.xlu0 %v392, 2
        %v396 = vpop.permute.xlu0 %395
        %vm397 = vcmask 15360
        %v398 = vsel %vm397, %v394, %v396
        %vm399 = vcmask 31744
        %v401 = vsel %vm399, %v390, 0
        %vm403 = vcmask 1043456
        %v404 = vsel %vm403, %v398, 0
        %406 = vmatprep.subr.mxu0 0.0
        %407 = vmatpush1.msra.mxu0 0.0
        %408 = vmatprep.subr.mxu0 0.0
        %409 = vmatpush1.msra.mxu0 0.0
        %410 = vmatprep.subr.mxu0 0.0
        %411 = vmatpush1.msra.mxu0 0.0
        %412 = vmatprep.subr.mxu0 0.0
        %413 = vmatpush1.msra.mxu0 0.0
        %414 = vmatprep.subr.mxu0 0.0
        %415 = vmatpush1.msra.mxu0 0.0
        %416 = vmatprep.subr.mxu0 0.0
        %417 = vmatpush1.msra.mxu0 0.0
        %418 = vmatprep.subr.mxu0 0.0
        %419 = vmatpush1.msra.mxu0 0.0
        %420 = vmatprep.subr.mxu0 0.0
        %421 = vmatpush1.msra.mxu0 0.0
        %422 = vmatprep.subr.mxu0 0.0
        %423 = vmatpush1.msra.mxu0 0.0
        %424 = vmatprep.subr.mxu0 0.0
        %425 = vmatpush1.msra.mxu0 0.0
        %426 = vmatprep.subr.mxu0 0.0
        %427 = vmatpush1.msra.mxu0 0.0
        %428 = vmatprep.subr.mxu0 0.0
        %429 = vmatpush1.msra.mxu0 0.0
        %430 = vmatprep.subr.mxu0 0.0
        %431 = vmatpush1.msra.mxu0 0.0
        %432 = vmatprep.subr.mxu0 0.0
        %433 = vmatpush1.msra.mxu0 0.0
        %434 = vmatprep.subr.mxu0 0.0
        %435 = vmatpush1.msra.mxu0 0.0
        %436 = vmatprep.subr.mxu0 0.0
        %437 = vmatpush1.msra.mxu0 %v404
        %438 = vmatprep.subr.mxu0 0.0
        %439 = vmatpush2.msra.mxu0 0.0
        %440 = vmatprep.subr.mxu0 0.0
        %441 = vmatpush2.msra.mxu0 0.0
        %442 = vmatprep.subr.mxu0 0.0
        %443 = vmatpush2.msra.mxu0 0.0
        %444 = vmatprep.subr.mxu0 0.0
        %445 = vmatpush2.msra.mxu0 0.0
        %446 = vmatprep.subr.mxu0 0.0
        %447 = vmatpush2.msra.mxu0 0.0
        %448 = vmatprep.subr.mxu0 0.0
        %449 = vmatpush2.msra.mxu0 0.0
        %450 = vmatprep.subr.mxu0 0.0
        %451 = vmatpush2.msra.mxu0 0.0
        %452 = vmatprep.subr.mxu0 0.0
        %453 = vmatpush2.msra.mxu0 0.0
        %454 = vmatprep.subr.mxu0 0.0
        %455 = vmatpush2.msra.mxu0 0.0
        %456 = vmatprep.subr.mxu0 0.0
        %457 = vmatpush2.msra.mxu0 0.0
        %458 = vmatprep.subr.mxu0 0.0
        %459 = vmatpush2.msra.mxu0 0.0
        %460 = vmatprep.subr.mxu0 0.0
        %461 = vmatpush2.msra.mxu0 0.0
        %462 = vmatprep.subr.mxu0 0.0
        %463 = vmatpush2.msra.mxu0 0.0
        %464 = vmatprep.subr.mxu0 0.0
        %465 = vmatpush2.msra.mxu0 0.0
        %466 = vmatprep.subr.mxu0 0.0
        %467 = vmatpush2.msra.mxu0 0.0
        %468 = vmatprep.subr.mxu0 0.0
        %469 = vmatpush2.msra.mxu0 0.0
        %470 = vmatprep.mubr.f32.mxu0 0.0
        %471 = vmatmul.mubr.f32.gmra.mxu0 %v401
        %v472 = vpop.f32.mrf.mxu0
        %v473 = vadd.f32 0.0, %v472
        %v474 = vpop.f32.mrf.mxu0
        %475 = vdwg.mxu0
        %476 = vrot.lane.b32.xlu0 %v388, 4
        %v477 = vpop.permute.xlu0 %476
        %478 = vrot.lane.b32.xlu0 %v392, 4
        %v479 = vpop.permute.xlu0 %478
        %v480 = vsel %vm399, %v477, %v479
        %v482 = vsel %vm399, %v387, 0
        %v484 = vsel %vm403, %v480, 0
        %486 = vmatprep.subr.mxu0 0.0
        %487 = vmatpush1.msra.mxu0 0.0
        %488 = vmatprep.subr.mxu0 0.0
        %489 = vmatpush1.msra.mxu0 0.0
        %490 = vmatprep.subr.mxu0 0.0
        %491 = vmatpush1.msra.mxu0 0.0
        %492 = vmatprep.subr.mxu0 0.0
        %493 = vmatpush1.msra.mxu0 0.0
        %494 = vmatprep.subr.mxu0 0.0
        %495 = vmatpush1.msra.mxu0 0.0
        %496 = vmatprep.subr.mxu0 0.0
        %497 = vmatpush1.msra.mxu0 0.0
        %498 = vmatprep.subr.mxu0 0.0
        %499 = vmatpush1.msra.mxu0 0.0
        %500 = vmatprep.subr.mxu0 0.0
        %501 = vmatpush1.msra.mxu0 0.0
        %502 = vmatprep.subr.mxu0 0.0
        %503 = vmatpush1.msra.mxu0 0.0
        %504 = vmatprep.subr.mxu0 0.0
        %505 = vmatpush1.msra.mxu0 0.0
        %506 = vmatprep.subr.mxu0 0.0
        %507 = vmatpush1.msra.mxu0 0.0
        %508 = vmatprep.subr.mxu0 0.0
        %509 = vmatpush1.msra.mxu0 0.0
        %510 = vmatprep.subr.mxu0 0.0
        %511 = vmatpush1.msra.mxu0 0.0
        %512 = vmatprep.subr.mxu0 0.0
        %513 = vmatpush1.msra.mxu0 0.0
        %514 = vmatprep.subr.mxu0 0.0
        %515 = vmatpush1.msra.mxu0 0.0
        %516 = vmatprep.subr.mxu0 0.0
        %517 = vmatpush1.msra.mxu0 %v484
        %518 = vmatprep.subr.mxu0 0.0
        %519 = vmatpush2.msra.mxu0 0.0
        %520 = vmatprep.subr.mxu0 0.0
        %521 = vmatpush2.msra.mxu0 0.0
        %522 = vmatprep.subr.mxu0 0.0
        %523 = vmatpush2.msra.mxu0 0.0
        %524 = vmatprep.subr.mxu0 0.0
        %525 = vmatpush2.msra.mxu0 0.0
        %526 = vmatprep.subr.mxu0 0.0
        %527 = vmatpush2.msra.mxu0 0.0
        %528 = vmatprep.subr.mxu0 0.0
        %529 = vmatpush2.msra.mxu0 0.0
        %530 = vmatprep.subr.mxu0 0.0
        %531 = vmatpush2.msra.mxu0 0.0
        %532 = vmatprep.subr.mxu0 0.0
        %533 = vmatpush2.msra.mxu0 0.0
        %534 = vmatprep.subr.mxu0 0.0
        %535 = vmatpush2.msra.mxu0 0.0
        %536 = vmatprep.subr.mxu0 0.0
        %537 = vmatpush2.msra.mxu0 0.0
        %538 = vmatprep.subr.mxu0 0.0
        %539 = vmatpush2.msra.mxu0 0.0
        %540 = vmatprep.subr.mxu0 0.0
        %541 = vmatpush2.msra.mxu0 0.0
        %542 = vmatprep.subr.mxu0 0.0
        %543 = vmatpush2.msra.mxu0 0.0
        %544 = vmatprep.subr.mxu0 0.0
        %545 = vmatpush2.msra.mxu0 0.0
        %546 = vmatprep.subr.mxu0 0.0
        %547 = vmatpush2.msra.mxu0 0.0
        %548 = vmatprep.subr.mxu0 0.0
        %549 = vmatpush2.msra.mxu0 0.0
        %550 = vmatprep.mubr.f32.mxu0 0.0
        %551 = vmatmul.mubr.f32.gmra.mxu0 %v482
        %v552 = vpop.f32.mrf.mxu0
        %v553 = vadd.f32 %v473, %v552
        %v554 = vpop.f32.mrf.mxu0
        %555 = vdwg.mxu0
        %s556 = scalar_lea.vmem %s2, 16
        %v557 = vld [vmem:[%s556] sm:$0xff]
        %v558 = vld [vmem:[#allocation2 + $0x4] sm:$0xf]
        %v560 = vsel %vm399, %v557, 0
        %v563 = vsel %vm403, %v558, 0
        %565 = vmatprep.subr.mxu0 0.0
        %566 = vmatpush1.msra.mxu0 0.0
        %567 = vmatprep.subr.mxu0 0.0
        %568 = vmatpush1.msra.mxu0 0.0
        %569 = vmatprep.subr.mxu0 0.0
        %570 = vmatpush1.msra.mxu0 0.0
        %571 = vmatprep.subr.mxu0 0.0
        %572 = vmatpush1.msra.mxu0 0.0
        %573 = vmatprep.subr.mxu0 0.0
        %574 = vmatpush1.msra.mxu0 0.0
        %575 = vmatprep.subr.mxu0 0.0
        %576 = vmatpush1.msra.mxu0 0.0
        %577 = vmatprep.subr.mxu0 0.0
        %578 = vmatpush1.msra.mxu0 0.0
        %579 = vmatprep.subr.mxu0 0.0
        %580 = vmatpush1.msra.mxu0 0.0
        %581 = vmatprep.subr.mxu0 0.0
        %582 = vmatpush1.msra.mxu0 0.0
        %583 = vmatprep.subr.mxu0 0.0
        %584 = vmatpush1.msra.mxu0 0.0
        %585 = vmatprep.subr.mxu0 0.0
        %586 = vmatpush1.msra.mxu0 0.0
        %587 = vmatprep.subr.mxu0 0.0
        %588 = vmatpush1.msra.mxu0 0.0
        %589 = vmatprep.subr.mxu0 0.0
        %590 = vmatpush1.msra.mxu0 0.0
        %591 = vmatprep.subr.mxu0 0.0
        %592 = vmatpush1.msra.mxu0 0.0
        %593 = vmatprep.subr.mxu0 0.0
        %594 = vmatpush1.msra.mxu0 0.0
        %595 = vmatprep.subr.mxu0 0.0
        %596 = vmatpush1.msra.mxu0 %v563
        %597 = vmatprep.subr.mxu0 0.0
        %598 = vmatpush2.msra.mxu0 0.0
        %599 = vmatprep.subr.mxu0 0.0
        %600 = vmatpush2.msra.mxu0 0.0
        %601 = vmatprep.subr.mxu0 0.0
        %602 = vmatpush2.msra.mxu0 0.0
        %603 = vmatprep.subr.mxu0 0.0
        %604 = vmatpush2.msra.mxu0 0.0
        %605 = vmatprep.subr.mxu0 0.0
        %606 = vmatpush2.msra.mxu0 0.0
        %607 = vmatprep.subr.mxu0 0.0
        %608 = vmatpush2.msra.mxu0 0.0
        %609 = vmatprep.subr.mxu0 0.0
        %610 = vmatpush2.msra.mxu0 0.0
        %611 = vmatprep.subr.mxu0 0.0
        %612 = vmatpush2.msra.mxu0 0.0
        %613 = vmatprep.subr.mxu0 0.0
        %614 = vmatpush2.msra.mxu0 0.0
        %615 = vmatprep.subr.mxu0 0.0
        %616 = vmatpush2.msra.mxu0 0.0
        %617 = vmatprep.subr.mxu0 0.0
        %618 = vmatpush2.msra.mxu0 0.0
        %619 = vmatprep.subr.mxu0 0.0
        %620 = vmatpush2.msra.mxu0 0.0
        %621 = vmatprep.subr.mxu0 0.0
        %622 = vmatpush2.msra.mxu0 0.0
        %623 = vmatprep.subr.mxu0 0.0
        %624 = vmatpush2.msra.mxu0 0.0
        %625 = vmatprep.subr.mxu0 0.0
        %626 = vmatpush2.msra.mxu0 0.0
        %627 = vmatprep.subr.mxu0 0.0
        %628 = vmatpush2.msra.mxu0 0.0
        %629 = vmatprep.mubr.f32.mxu0 0.0
        %630 = vmatmul.mubr.f32.gmra.mxu0 %v560
        %v631 = vpop.f32.mrf.mxu0
        %v632 = vadd.f32 0.0, %v631
        %v633 = vpop.f32.mrf.mxu0
        %634 = vdwg.mxu0
        %v635 = vadd.f32 %v553, %v632
        %v636 = vld [vmem:[%s3] sm:$0xff]
        %638 = vset.pattern.permute.xlu0 0
        %639 = vperm.xlu0 %638, %v636
        %v640 = vpop.permute.xlu0 %639
        %v642 = vadd.f32 %v635, %v640
        %v643 = vmax.f32 %v642, 0.0
        %vm644 = vcmask 162816
        %645 = vst.msk [vmem:[#allocation3] sm:$0xff] %vm644, %v643
        %p646 = scmp.eq.s32.totalorder %s27, 0
        %s647 = sadd.s32 %s354, 18
        %p648 = scmp.gt.s32.totalorder %s647, 16
        %p649 = por %p646, %p648
        // Predicated region
        $region57: #{tpu_custom_call.1} parent=51 // pred_check
          %p650 = pneg %p649
        $region58: #{tpu_custom_call.1} parent=51 // pred_check_branch
          %652 = sbr.rel (%p650) target = $region60
        $region59: #{tpu_custom_call.1} parent=51 // pred_region
          %s653 = ssub.s32 %s354, 2
          %v654 = vlaneseq
          %v655 = vand.u32 %v654, 127
          %v656 = vstv %s653
          %v657 = vadd.s32 %v656, %v655
          %vm658 = vcmp.ge.s32.totalorder %v657, 0
          %vm659 = vcmp.lt.s32.totalorder %v657, 16
          %vm660 = vmand %vm658, %vm659
          %v661 = vld [vmem:[#allocation3] sm:$0xff]
          %v662 = vsel %vm660, 1, 0
          %vm663 = vcmp.eq.s32.totalorder %v662, 1
          %v664 = vsel %vm663, %v661, 0.0
          %665 = vst.msk [vmem:[#allocation3] sm:$0xff] %vm644, %v664
        $region60: #{tpu_custom_call.1} parent=51 // pred_fallthru
          _
        %v666 = vld [vmem:[%s4] sm:$0xff]
        %v667 = vld [vmem:[#allocation3] sm:$0xff]
        %s668 = scalar_lea.vmem %s4, 8
        %v669 = vld [vmem:[%s668] sm:$0xff]
        %671 = vrot.lane.b32.xlu0 %v667, 126
        %v672 = vpop.permute.xlu0 %671
        %vm674 = vcmask 64512
        %v676 = vsel %vm674, %v669, 0
        %678 = vmatprep.subr.mxu0 0.0
        %679 = vmatpush1.msra.mxu0 0.0
        %680 = vmatprep.subr.mxu0 0.0
        %681 = vmatpush1.msra.mxu0 0.0
        %682 = vmatprep.subr.mxu0 0.0
        %683 = vmatpush1.msra.mxu0 0.0
        %684 = vmatprep.subr.mxu0 0.0
        %685 = vmatpush1.msra.mxu0 0.0
        %686 = vmatprep.subr.mxu0 0.0
        %687 = vmatpush1.msra.mxu0 0.0
        %688 = vmatprep.subr.mxu0 0.0
        %689 = vmatpush1.msra.mxu0 0.0
        %690 = vmatprep.subr.mxu0 0.0
        %691 = vmatpush1.msra.mxu0 0.0
        %692 = vmatprep.subr.mxu0 0.0
        %693 = vmatpush1.msra.mxu0 0.0
        %694 = vmatprep.subr.mxu0 0.0
        %695 = vmatpush1.msra.mxu0 0.0
        %696 = vmatprep.subr.mxu0 0.0
        %697 = vmatpush1.msra.mxu0 0.0
        %698 = vmatprep.subr.mxu0 0.0
        %699 = vmatpush1.msra.mxu0 0.0
        %700 = vmatprep.subr.mxu0 0.0
        %701 = vmatpush1.msra.mxu0 0.0
        %702 = vmatprep.subr.mxu0 0.0
        %703 = vmatpush1.msra.mxu0 0.0
        %704 = vmatprep.subr.mxu0 0.0
        %705 = vmatpush1.msra.mxu0 0.0
        %706 = vmatprep.subr.mxu0 0.0
        %707 = vmatpush1.msra.mxu0 0.0
        %708 = vmatprep.subr.mxu0 0.0
        %709 = vmatpush1.msra.mxu0 %v672
        %710 = vmatprep.subr.mxu0 0.0
        %711 = vmatpush2.msra.mxu0 0.0
        %712 = vmatprep.subr.mxu0 0.0
        %713 = vmatpush2.msra.mxu0 0.0
        %714 = vmatprep.subr.mxu0 0.0
        %715 = vmatpush2.msra.mxu0 0.0
        %716 = vmatprep.subr.mxu0 0.0
        %717 = vmatpush2.msra.mxu0 0.0
        %718 = vmatprep.subr.mxu0 0.0
        %719 = vmatpush2.msra.mxu0 0.0
        %720 = vmatprep.subr.mxu0 0.0
        %721 = vmatpush2.msra.mxu0 0.0
        %722 = vmatprep.subr.mxu0 0.0
        %723 = vmatpush2.msra.mxu0 0.0
        %724 = vmatprep.subr.mxu0 0.0
        %725 = vmatpush2.msra.mxu0 0.0
        %726 = vmatprep.subr.mxu0 0.0
        %727 = vmatpush2.msra.mxu0 0.0
        %728 = vmatprep.subr.mxu0 0.0
        %729 = vmatpush2.msra.mxu0 0.0
        %730 = vmatprep.subr.mxu0 0.0
        %731 = vmatpush2.msra.mxu0 0.0
        %732 = vmatprep.subr.mxu0 0.0
        %733 = vmatpush2.msra.mxu0 0.0
        %734 = vmatprep.subr.mxu0 0.0
        %735 = vmatpush2.msra.mxu0 0.0
        %736 = vmatprep.subr.mxu0 0.0
        %737 = vmatpush2.msra.mxu0 0.0
        %738 = vmatprep.subr.mxu0 0.0
        %739 = vmatpush2.msra.mxu0 0.0
        %740 = vmatprep.subr.mxu0 0.0
        %741 = vmatpush2.msra.mxu0 0.0
        %742 = vmatprep.mubr.f32.mxu0 0.0
        %743 = vmatmul.mubr.f32.gmra.mxu0 %v676
        %v744 = vpop.f32.mrf.mxu0
        %v745 = vadd.f32 0.0, %v744
        %v746 = vpop.f32.mrf.mxu0
        %747 = vdwg.mxu0
        %v749 = vsel %vm674, %v666, 0
        %751 = vmatprep.subr.mxu0 0.0
        %752 = vmatpush1.msra.mxu0 0.0
        %753 = vmatprep.subr.mxu0 0.0
        %754 = vmatpush1.msra.mxu0 0.0
        %755 = vmatprep.subr.mxu0 0.0
        %756 = vmatpush1.msra.mxu0 0.0
        %757 = vmatprep.subr.mxu0 0.0
        %758 = vmatpush1.msra.mxu0 0.0
        %759 = vmatprep.subr.mxu0 0.0
        %760 = vmatpush1.msra.mxu0 0.0
        %761 = vmatprep.subr.mxu0 0.0
        %762 = vmatpush1.msra.mxu0 0.0
        %763 = vmatprep.subr.mxu0 0.0
        %764 = vmatpush1.msra.mxu0 0.0
        %765 = vmatprep.subr.mxu0 0.0
        %766 = vmatpush1.msra.mxu0 0.0
        %767 = vmatprep.subr.mxu0 0.0
        %768 = vmatpush1.msra.mxu0 0.0
        %769 = vmatprep.subr.mxu0 0.0
        %770 = vmatpush1.msra.mxu0 0.0
        %771 = vmatprep.subr.mxu0 0.0
        %772 = vmatpush1.msra.mxu0 0.0
        %773 = vmatprep.subr.mxu0 0.0
        %774 = vmatpush1.msra.mxu0 0.0
        %775 = vmatprep.subr.mxu0 0.0
        %776 = vmatpush1.msra.mxu0 0.0
        %777 = vmatprep.subr.mxu0 0.0
        %778 = vmatpush1.msra.mxu0 0.0
        %779 = vmatprep.subr.mxu0 0.0
        %780 = vmatpush1.msra.mxu0 0.0
        %781 = vmatprep.subr.mxu0 0.0
        %782 = vmatpush1.msra.mxu0 %v667
        %783 = vmatprep.subr.mxu0 0.0
        %784 = vmatpush2.msra.mxu0 0.0
        %785 = vmatprep.subr.mxu0 0.0
        %786 = vmatpush2.msra.mxu0 0.0
        %787 = vmatprep.subr.mxu0 0.0
        %788 = vmatpush2.msra.mxu0 0.0
        %789 = vmatprep.subr.mxu0 0.0
        %790 = vmatpush2.msra.mxu0 0.0
        %791 = vmatprep.subr.mxu0 0.0
        %792 = vmatpush2.msra.mxu0 0.0
        %793 = vmatprep.subr.mxu0 0.0
        %794 = vmatpush2.msra.mxu0 0.0
        %795 = vmatprep.subr.mxu0 0.0
        %796 = vmatpush2.msra.mxu0 0.0
        %797 = vmatprep.subr.mxu0 0.0
        %798 = vmatpush2.msra.mxu0 0.0
        %799 = vmatprep.subr.mxu0 0.0
        %800 = vmatpush2.msra.mxu0 0.0
        %801 = vmatprep.subr.mxu0 0.0
        %802 = vmatpush2.msra.mxu0 0.0
        %803 = vmatprep.subr.mxu0 0.0
        %804 = vmatpush2.msra.mxu0 0.0
        %805 = vmatprep.subr.mxu0 0.0
        %806 = vmatpush2.msra.mxu0 0.0
        %807 = vmatprep.subr.mxu0 0.0
        %808 = vmatpush2.msra.mxu0 0.0
        %809 = vmatprep.subr.mxu0 0.0
        %810 = vmatpush2.msra.mxu0 0.0
        %811 = vmatprep.subr.mxu0 0.0
        %812 = vmatpush2.msra.mxu0 0.0
        %813 = vmatprep.subr.mxu0 0.0
        %814 = vmatpush2.msra.mxu0 0.0
        %815 = vmatprep.mubr.f32.mxu0 0.0
        %816 = vmatmul.mubr.f32.gmra.mxu0 %v749
        %v817 = vpop.f32.mrf.mxu0
        %v818 = vadd.f32 %v745, %v817
        %v819 = vpop.f32.mrf.mxu0
        %820 = vdwg.mxu0
        %s821 = scalar_lea.vmem %s4, 16
        %v822 = vld [vmem:[%s821] sm:$0xff]
        %823 = vrot.lane.b32.xlu0 %v667, 124
        %v824 = vpop.permute.xlu0 %823
        %v827 = vsel %vm674, %v822, 0
        %829 = vmatprep.subr.mxu0 0.0
        %830 = vmatpush1.msra.mxu0 0.0
        %831 = vmatprep.subr.mxu0 0.0
        %832 = vmatpush1.msra.mxu0 0.0
        %833 = vmatprep.subr.mxu0 0.0
        %834 = vmatpush1.msra.mxu0 0.0
        %835 = vmatprep.subr.mxu0 0.0
        %836 = vmatpush1.msra.mxu0 0.0
        %837 = vmatprep.subr.mxu0 0.0
        %838 = vmatpush1.msra.mxu0 0.0
        %839 = vmatprep.subr.mxu0 0.0
        %840 = vmatpush1.msra.mxu0 0.0
        %841 = vmatprep.subr.mxu0 0.0
        %842 = vmatpush1.msra.mxu0 0.0
        %843 = vmatprep.subr.mxu0 0.0
        %844 = vmatpush1.msra.mxu0 0.0
        %845 = vmatprep.subr.mxu0 0.0
        %846 = vmatpush1.msra.mxu0 0.0
        %847 = vmatprep.subr.mxu0 0.0
        %848 = vmatpush1.msra.mxu0 0.0
        %849 = vmatprep.subr.mxu0 0.0
        %850 = vmatpush1.msra.mxu0 0.0
        %851 = vmatprep.subr.mxu0 0.0
        %852 = vmatpush1.msra.mxu0 0.0
        %853 = vmatprep.subr.mxu0 0.0
        %854 = vmatpush1.msra.mxu0 0.0
        %855 = vmatprep.subr.mxu0 0.0
        %856 = vmatpush1.msra.mxu0 0.0
        %857 = vmatprep.subr.mxu0 0.0
        %858 = vmatpush1.msra.mxu0 0.0
        %859 = vmatprep.subr.mxu0 0.0
        %860 = vmatpush1.msra.mxu0 %v824
        %861 = vmatprep.subr.mxu0 0.0
        %862 = vmatpush2.msra.mxu0 0.0
        %863 = vmatprep.subr.mxu0 0.0
        %864 = vmatpush2.msra.mxu0 0.0
        %865 = vmatprep.subr.mxu0 0.0
        %866 = vmatpush2.msra.mxu0 0.0
        %867 = vmatprep.subr.mxu0 0.0
        %868 = vmatpush2.msra.mxu0 0.0
        %869 = vmatprep.subr.mxu0 0.0
        %870 = vmatpush2.msra.mxu0 0.0
        %871 = vmatprep.subr.mxu0 0.0
        %872 = vmatpush2.msra.mxu0 0.0
        %873 = vmatprep.subr.mxu0 0.0
        %874 = vmatpush2.msra.mxu0 0.0
        %875 = vmatprep.subr.mxu0 0.0
        %876 = vmatpush2.msra.mxu0 0.0
        %877 = vmatprep.subr.mxu0 0.0
        %878 = vmatpush2.msra.mxu0 0.0
        %879 = vmatprep.subr.mxu0 0.0
        %880 = vmatpush2.msra.mxu0 0.0
        %881 = vmatprep.subr.mxu0 0.0
        %882 = vmatpush2.msra.mxu0 0.0
        %883 = vmatprep.subr.mxu0 0.0
        %884 = vmatpush2.msra.mxu0 0.0
        %885 = vmatprep.subr.mxu0 0.0
        %886 = vmatpush2.msra.mxu0 0.0
        %887 = vmatprep.subr.mxu0 0.0
        %888 = vmatpush2.msra.mxu0 0.0
        %889 = vmatprep.subr.mxu0 0.0
        %890 = vmatpush2.msra.mxu0 0.0
        %891 = vmatprep.subr.mxu0 0.0
        %892 = vmatpush2.msra.mxu0 0.0
        %893 = vmatprep.mubr.f32.mxu0 0.0
        %894 = vmatmul.mubr.f32.gmra.mxu0 %v827
        %v895 = vpop.f32.mrf.mxu0
        %v896 = vadd.f32 0.0, %v895
        %v897 = vpop.f32.mrf.mxu0
        %898 = vdwg.mxu0
        %v899 = vadd.f32 %v818, %v896
        %v900 = vld [vmem:[%s5] sm:$0xff]
        %902 = vset.pattern.permute.xlu0 0
        %903 = vperm.xlu0 %902, %v900
        %v904 = vpop.permute.xlu0 %903
        %v906 = vadd.f32 %v899, %v904
        %v907 = vmax.f32 %v906, 0.0
        %v908 = vld [vmem:[#allocation2 + $0x4] sm:$0xf]
        %v909 = vld [vmem:[%s6] sm:$0xff]
        %v910 = vld [vmem:[%s7] sm:$0xff]
        %912 = vset.pattern.permute.xlu0 0
        %913 = vperm.xlu0 %912, %v910
        %v914 = vpop.permute.xlu0 %913
        %v917 = vsel %vm399, %v909, 0
        %v920 = vsel %vm403, %v908, 0
        %922 = vmatprep.subr.mxu0 0.0
        %923 = vmatpush1.msra.mxu0 0.0
        %924 = vmatprep.subr.mxu0 0.0
        %925 = vmatpush1.msra.mxu0 0.0
        %926 = vmatprep.subr.mxu0 0.0
        %927 = vmatpush1.msra.mxu0 0.0
        %928 = vmatprep.subr.mxu0 0.0
        %929 = vmatpush1.msra.mxu0 0.0
        %930 = vmatprep.subr.mxu0 0.0
        %931 = vmatpush1.msra.mxu0 0.0
        %932 = vmatprep.subr.mxu0 0.0
        %933 = vmatpush1.msra.mxu0 0.0
        %934 = vmatprep.subr.mxu0 0.0
        %935 = vmatpush1.msra.mxu0 0.0
        %936 = vmatprep.subr.mxu0 0.0
        %937 = vmatpush1.msra.mxu0 0.0
        %938 = vmatprep.subr.mxu0 0.0
        %939 = vmatpush1.msra.mxu0 0.0
        %940 = vmatprep.subr.mxu0 0.0
        %941 = vmatpush1.msra.mxu0 0.0
        %942 = vmatprep.subr.mxu0 0.0
        %943 = vmatpush1.msra.mxu0 0.0
        %944 = vmatprep.subr.mxu0 0.0
        %945 = vmatpush1.msra.mxu0 0.0
        %946 = vmatprep.subr.mxu0 0.0
        %947 = vmatpush1.msra.mxu0 0.0
        %948 = vmatprep.subr.mxu0 0.0
        %949 = vmatpush1.msra.mxu0 0.0
        %950 = vmatprep.subr.mxu0 0.0
        %951 = vmatpush1.msra.mxu0 0.0
        %952 = vmatprep.subr.mxu0 0.0
        %953 = vmatpush1.msra.mxu0 %v920
        %954 = vmatprep.subr.mxu0 0.0
        %955 = vmatpush2.msra.mxu0 0.0
        %956 = vmatprep.subr.mxu0 0.0
        %957 = vmatpush2.msra.mxu0 0.0
        %958 = vmatprep.subr.mxu0 0.0
        %959 = vmatpush2.msra.mxu0 0.0
        %960 = vmatprep.subr.mxu0 0.0
        %961 = vmatpush2.msra.mxu0 0.0
        %962 = vmatprep.subr.mxu0 0.0
        %963 = vmatpush2.msra.mxu0 0.0
        %964 = vmatprep.subr.mxu0 0.0
        %965 = vmatpush2.msra.mxu0 0.0
        %966 = vmatprep.subr.mxu0 0.0
        %967 = vmatpush2.msra.mxu0 0.0
        %968 = vmatprep.subr.mxu0 0.0
        %969 = vmatpush2.msra.mxu0 0.0
        %970 = vmatprep.subr.mxu0 0.0
        %971 = vmatpush2.msra.mxu0 0.0
        %972 = vmatprep.subr.mxu0 0.0
        %973 = vmatpush2.msra.mxu0 0.0
        %974 = vmatprep.subr.mxu0 0.0
        %975 = vmatpush2.msra.mxu0 0.0
        %976 = vmatprep.subr.mxu0 0.0
        %977 = vmatpush2.msra.mxu0 0.0
        %978 = vmatprep.subr.mxu0 0.0
        %979 = vmatpush2.msra.mxu0 0.0
        %980 = vmatprep.subr.mxu0 0.0
        %981 = vmatpush2.msra.mxu0 0.0
        %982 = vmatprep.subr.mxu0 0.0
        %983 = vmatpush2.msra.mxu0 0.0
        %984 = vmatprep.subr.mxu0 0.0
        %985 = vmatpush2.msra.mxu0 0.0
        %986 = vmatprep.mubr.f32.mxu0 0.0
        %987 = vmatmul.mubr.f32.gmra.mxu0 %v917
        %v988 = vpop.f32.mrf.mxu0
        %v989 = vadd.f32 %v914, %v988
        %v990 = vpop.f32.mrf.mxu0
        %991 = vdwg.mxu0
        %v992 = vadd.f32 %v907, %v989
        %v993 = vmax.f32 %v992, 0.0
        %vm994 = vcmask 130048
        %995 = vst.msk [vmem:[%s339] sm:$0xff] %vm994, %v993
        %s996 = sand.u32 %s226, 1
        %s997 = scalar_lea.sflag [#allocation5], %s996
        %s998 = sand.u32 %s226, 1
        %s999 = smul.addr %s998, 8
        %s1000 = scalar_lea.vmem [#allocation4], %s999
        // Predicated region
        $region61: #{tpu_custom_call.1} parent=51 // pred_check
          %p1001 = pneg %p236
        $region62: #{tpu_custom_call.1} parent=51 // pred_check_branch
          %1003 = sbr.rel (%p1001) target = $region64
        $region63: #{tpu_custom_call.1} parent=51 // pred_region
          %s1005 = ssub.s32 128, 128
          %1006 = vsyncadd %s997, %s1005
          %s1007 = sadd.s32 %s27, %s26
          %s1008 = smul.addr %s1007, 128
          %s1009 = scalar_lea.hbm %s8, %s1008
          %s1011 = sshll.u32 %s1000, 4
          %s1012 = int_to_ptr.vmem [resolvable:$true] %s1011
          %1014 = dma.vmem_to_hbm [thread:$0]  %s1012, 128, %s1009, %s997
        $region64: #{tpu_custom_call.1} parent=51 // pred_fallthru
          _
      $region52: #{tpu_custom_call.1} parent=5 // pred_fallthru
        _
      %p1015 = scmp.le.s32.totalorder 2, %s17
      // Predicated region
      $region65: #{tpu_custom_call.1} parent=5 // pred_check
        %p1016 = pneg %p1015
      $region66: #{tpu_custom_call.1} parent=5 // pred_check_branch
        %1018 = sbr.rel (%p1016) target = $region68
      $region67: #{tpu_custom_call.1} parent=5 // pred_region
        %s1019 = ssub.s32 %s17, 2
        // Predicated region
        $region69: #{tpu_custom_call.1} parent=67 // pred_check
          %p1020 = pneg %p242
        $region70: #{tpu_custom_call.1} parent=67 // pred_check_branch
          %1022 = sbr.rel (%p1020) target = $region72
        $region71: #{tpu_custom_call.1} parent=67 // pred_region
          %s1023 = sand.u32 %s227, 1
          %s1024 = scalar_lea.sflag [#allocation5], %s1023
          %s1025 = sand.u32 %s227, 1
          %s1026 = smul.addr %s1025, 8
          %s1027 = scalar_lea.vmem [#allocation4], %s1026
          %1028 = dma.done %s1024, 128
        $region72: #{tpu_custom_call.1} parent=67 // pred_fallthru
          _
      $region68: #{tpu_custom_call.1} parent=5 // pred_fallthru
        _
    $region6: #{tpu_custom_call.1} parent=1 // loop_footer
      %s21 = sadd.s32 1, %s17
    $region7: #{tpu_custom_call.1} parent=1 // loop_footer_branch
      %16 = sbr.rel target = $region3
    $region8: #{tpu_custom_call.1} parent=1 // loop_exit
      _
    %1029 = vsyncpa [#allocation5], 1
    %s1030 = scalar_lea.sflag [#allocation5], 1
    %1031 = vsyncpa %s1030, 1

</llo_original>
